<compile_context>
chip_gen: v6e
topology: v6e:2x2x1
jax: 0.10.0
libtpu: 0.0.40
codegen_flags: <defaults>
</compile_context>

<pallas_src>
import jax
import jax.numpy as jnp
from jax import lax
from jax.experimental import pallas as pl
from jax.experimental.pallas import tpu as pltpu


def _loss_kernel(logits_ref, tgt_ref, nw_ref, out_ref):
    """One block of Nb captions per grid step.

    logits_ref : (Nb, V, T) VMEM tile of batch_pred (original dtype/layout)
    tgt_ref    : (Nb, T)    int32 VMEM tile of targets
    nw_ref     : (Nb, 1)    int32 VMEM tile of per-caption word counts
    out_ref    : (1, 1, 1)  f32 partial loss sum for this block
    """
    # Cast to f32 and move vocab onto the lane axis (XLU transpose).
    x = logits_ref[...].astype(jnp.float32)          # (Nb, V, T)
    x = jnp.transpose(x, (0, 2, 1))                  # (Nb, T, V)
    nb, t, v = x.shape

    # Numerically stable logsumexp over the vocab (lane) axis.
    m = jnp.max(x, axis=-1, keepdims=True)                       # (Nb, T, 1)
    lse = m[..., 0] + jnp.log(jnp.sum(jnp.exp(x - m), axis=-1))  # (Nb, T)

    # Gather the target-class logit with a one-hot select (no dynamic gather).
    vocab_ids = lax.broadcasted_iota(jnp.int32, (nb, t, v), 2)   # (Nb, T, V)
    onehot = vocab_ids == tgt_ref[...][:, :, None]               # (Nb, T, V)
    tgt_logit = jnp.sum(jnp.where(onehot, x, 0.0), axis=-1)      # (Nb, T)

    ce = lse - tgt_logit                                         # (Nb, T)

    # Mask positions >= n_words for each caption (padded rows have nw == 0).
    t_ids = lax.broadcasted_iota(jnp.int32, (nb, t), 1)          # (Nb, T)
    mask = t_ids < nw_ref[...]                                   # (Nb, T)
    total = jnp.sum(jnp.where(mask, ce, 0.0))

    out_ref[...] = jnp.reshape(total, (1, 1, 1))


def _pick_block_rows(n, v, t, itemsize):
    """Choose rows-per-block so double-buffered tiles stay well inside VMEM."""
    budget = 8 * 1024 * 1024  # conservative: fits v5e/v6e/v7x scoped VMEM
    bytes_per_row = v * t * (itemsize + 4)  # input tile + in-kernel f32 copy
    nb = max(1, budget // (2 * bytes_per_row))
    nb = min(nb, n)
    if nb >= 8:
        nb = (nb // 8) * 8  # keep the targets' second-minor dim 8-aligned
    return int(nb)


def caption_loss(batch_pred, captions, num_words, *, block_rows=None):
    """batch_pred: (B*S, V, T), captions: (B, S, T) int, num_words: (B, S) int."""
    B, S, T = captions.shape
    N = B * S
    V = batch_pred.shape[1]

    if block_rows is None:
        block_rows = _pick_block_rows(N, V, T, jnp.dtype(batch_pred.dtype).itemsize)
    num_blocks = pl.cdiv(N, block_rows)
    n_pad = num_blocks * block_rows

    # Cheap glue on the small arrays only (targets / word counts).
    tgt = captions.reshape(N, T).astype(jnp.int32)
    nw = num_words.reshape(N, 1).astype(jnp.int32)
    if n_pad != N:
        tgt = jnp.pad(tgt, ((0, n_pad - N), (0, 0)))
        nw = jnp.pad(nw, ((0, n_pad - N), (0, 0)))  # nw=0 => row fully masked

    partial = pl.pallas_call(
        _loss_kernel,
        out_shape=jax.ShapeDtypeStruct((num_blocks, 1, 1), jnp.float32),
        grid_spec=pltpu.PrefetchScalarGridSpec(
            num_scalar_prefetch=0,
            grid=(num_blocks,),
            in_specs=[
                pl.BlockSpec((block_rows, V, T), lambda i: (i, 0, 0)),
                pl.BlockSpec((block_rows, T), lambda i: (i, 0)),
                pl.BlockSpec((block_rows, 1), lambda i: (i, 0)),
            ],
            out_specs=pl.BlockSpec((1, 1, 1), lambda i: (i, 0, 0)),
        ),
        compiler_params=pltpu.CompilerParams(
            dimension_semantics=("parallel",),
            vmem_limit_bytes=32 * 1024 * 1024,
        ),
    )(batch_pred, tgt, nw)

    total_words = jnp.sum(num_words).astype(jnp.float32)
    return jnp.sum(partial) / total_words


def _reference_loss(batch_pred, captions, num_words):
    """Pure-JAX reference mirroring the PyTorch forward."""
    B, S, T = captions.shape
    N = B * S
    logits = jnp.transpose(batch_pred, (0, 2, 1)).astype(jnp.float32)  # (N,T,V)
    tgt = captions.reshape(N, T)
    nw = num_words.reshape(N)
    logz = jax.nn.logsumexp(logits, axis=-1)                           # (N,T)
    tgt_logit = jnp.take_along_axis(logits, tgt[..., None], axis=-1)[..., 0]
    ce = logz - tgt_logit                                              # (N,T)
    mask = jnp.arange(T)[None, :] < nw[:, None]
    return jnp.sum(jnp.where(mask, ce, 0.0)) / jnp.sum(nw).astype(jnp.float32)


if __name__ == "__main__":
    key = jax.random.PRNGKey(0)
    k1, k2, k3 = jax.random.split(key, 3)

    B, S, T, V = 2, 4, 8, 128          # small shapes consistent with forward()
    N = B * S

    batch_pred = jax.random.normal(k1, (N, V, T), dtype=jnp.float32)
    captions = jax.random.randint(k2, (B, S, T), 0, V, dtype=jnp.int32)
    num_words = jax.random.randint(k3, (B, S), 1, T + 1, dtype=jnp.int32)

    loss = jax.block_until_ready(caption_loss(batch_pred, captions, num_words))
    ref = jax.block_until_ready(_reference_loss(batch_pred, captions, num_words))

    assert jnp.allclose(loss, ref, rtol=1e-5, atol=1e-5), (loss, ref)
    print("KERNEL_OK")
</pallas_src>

<mosaic_0001>
module attributes {stable_mosaic.version = 11 : i64} {
  func.func @_loss_kernel(%arg0: i32, %arg1: memref<8x128x8xf32, #tpu.memory_space<vmem>>, %arg2: memref<8x8xi32, #tpu.memory_space<vmem>>, %arg3: memref<8x1xi32, #tpu.memory_space<vmem>>, %arg4: memref<1x1x1xf32, #tpu.memory_space<vmem>>) attributes {dimension_semantics = [#tpu.dimension_semantics<parallel>], iteration_bounds = array<i64: 1>, scalar_prefetch = 0 : i64, scratch_operands = 0 : i64, tpu.core_type = #tpu.core_type<tc>, window_params = [{transform_indices = @transform_0, window_bounds = array<i64: 8, 128, 8>}, {transform_indices = @transform_1, window_bounds = array<i64: 8, 8>}, {transform_indices = @transform_2, window_bounds = array<i64: 8, 1>}, {transform_indices = @transform_3, window_bounds = array<i64: 1, 1, 1>}]} {
    %c0 = arith.constant 0 : index
    %c0_0 = arith.constant 0 : index
    %c0_1 = arith.constant 0 : index
    %0 = vector.load %arg1[%c0, %c0_0, %c0_1] : memref<8x128x8xf32, #tpu.memory_space<vmem>>, vector<8x128x8xf32>
    %1 = tpu.transpose %0, [0, 2, 1] : vector<8x128x8xf32> -> vector<8x8x128xf32>
    %cst = arith.constant dense<0xFF800000> : vector<8x8xf32>
    %2 = vector.multi_reduction <maximumf>, %1, %cst [2] : vector<8x8x128xf32> to vector<8x8xf32>
    %3 = vector.shape_cast %2 : vector<8x8xf32> to vector<8x8x1xf32>
    %4 = vector.shape_cast %3 : vector<8x8x1xf32> to vector<8x8xf32>
    %5 = vector.broadcast %3 : vector<8x8x1xf32> to vector<8x8x128xf32>
    %6 = arith.subf %1, %5 : vector<8x8x128xf32>
    %7 = math.exp %6 : vector<8x8x128xf32>
    %cst_2 = arith.constant dense<0.000000e+00> : vector<8x8xf32>
    %8 = vector.multi_reduction <add>, %7, %cst_2 [2] : vector<8x8x128xf32> to vector<8x8xf32>
    %9 = math.log %8 : vector<8x8xf32>
    %10 = arith.addf %4, %9 : vector<8x8xf32>
    %11 = tpu.iota {dimensions = array<i32: 2>} : vector<8x8x128xi32>
    %c0_3 = arith.constant 0 : index
    %c0_4 = arith.constant 0 : index
    %12 = vector.load %arg2[%c0_3, %c0_4] : memref<8x8xi32, #tpu.memory_space<vmem>>, vector<8x8xi32>
    %13 = vector.shape_cast %12 : vector<8x8xi32> to vector<8x8x1xi32>
    %14 = vector.broadcast %13 : vector<8x8x1xi32> to vector<8x8x128xi32>
    %15 = arith.cmpi eq, %11, %14 : vector<8x8x128xi32>
    %cst_5 = arith.constant 0.000000e+00 : f32
    %16 = vector.broadcast %cst_5 : f32 to vector<8x8x128xf32>
    %17 = arith.select %15, %1, %16 : vector<8x8x128xi1>, vector<8x8x128xf32>
    %cst_6 = arith.constant dense<0.000000e+00> : vector<8x8xf32>
    %18 = vector.multi_reduction <add>, %17, %cst_6 [2] : vector<8x8x128xf32> to vector<8x8xf32>
    %19 = arith.subf %10, %18 : vector<8x8xf32>
    %20 = tpu.iota {dimensions = array<i32: 1>} : vector<8x8xi32>
    %c0_7 = arith.constant 0 : index
    %c0_8 = arith.constant 0 : index
    %21 = vector.load %arg3[%c0_7, %c0_8] : memref<8x1xi32, #tpu.memory_space<vmem>>, vector<8x1xi32>
    %22 = vector.broadcast %21 : vector<8x1xi32> to vector<8x8xi32>
    %23 = arith.cmpi slt, %20, %22 : vector<8x8xi32>
    %cst_9 = arith.constant 0.000000e+00 : f32
    %24 = vector.broadcast %cst_9 : f32 to vector<8x8xf32>
    %25 = arith.select %23, %19, %24 : vector<8x8xi1>, vector<8x8xf32>
    %26 = vector.shape_cast %25 : vector<8x8xf32> to vector<1x8x8xf32>
    %cst_10 = arith.constant dense<0.000000e+00> : vector<1xf32>
    %27 = vector.multi_reduction <add>, %26, %cst_10 [1, 2] : vector<1x8x8xf32> to vector<1xf32>
    %28 = vector.shape_cast %27 : vector<1xf32> to vector<1x1x1xf32>
    %29 = vector.extract %28[0, 0, 0] : f32 from vector<1x1x1xf32>
    %30 = vector.broadcast %29 : f32 to vector<1x1x1xf32>
    %c0_11 = arith.constant 0 : index
    %c0_12 = arith.constant 0 : index
    %c0_13 = arith.constant 0 : index
    %31 = vector.load %arg4[%c0_11, %c0_12, %c0_13] : memref<1x1x1xf32, #tpu.memory_space<vmem>>, vector<1x1x1xf32>
    tpu.vector_store %arg4[%c0_11, %c0_12, %c0_13], %30 {strides = array<i32>} : memref<1x1x1xf32, #tpu.memory_space<vmem>>, vector<1x1x1xf32>,
    return
  }
  func.func @transform_0(%arg0: i32) -> (i32, i32, i32) {
    %c0_i32 = arith.constant 0 : i32
    %c0_i32_0 = arith.constant 0 : i32
    %c0_i32_1 = arith.constant 0 : i32
    return %arg0, %c0_i32, %c0_i32_0 : i32, i32, i32
  }
  func.func @transform_1(%arg0: i32) -> (i32, i32) {
    %c0_i32 = arith.constant 0 : i32
    %c0_i32_0 = arith.constant 0 : i32
    return %arg0, %c0_i32 : i32, i32
  }
  func.func @transform_2(%arg0: i32) -> (i32, i32) {
    %c0_i32 = arith.constant 0 : i32
    %c0_i32_0 = arith.constant 0 : i32
    return %arg0, %c0_i32 : i32, i32
  }
  func.func @transform_3(%arg0: i32) -> (i32, i32, i32) {
    %c0_i32 = arith.constant 0 : i32
    %c0_i32_0 = arith.constant 0 : i32
    %c0_i32_1 = arith.constant 0 : i32
    return %arg0, %c0_i32, %c0_i32_0 : i32, i32, i32
  }
}

</mosaic_0001>

<llo_original>
// kernel: tpu_custom_call.1
$region0: #{tpu_custom_call.1}
  #allocation0 [shape = 'u32[]', space=smem, size = 0x4, offset = 0x4, fixed_abs, tag = 'smem constant byte address 0x4 - core index']
  #allocation1 [shape = 'u32[144,128]{1,0:T(1,128)}', space=vmem, size = 0x12000, scoped, tag = 'internal scratch']
  %s0 = inlined_call_operand.vmem [shape: f32[8,128,8], index: 0, kind: input, shape index: {}]
  %s1 = inlined_call_operand.vmem [shape: s32[8,8], index: 1, kind: input, shape index: {}]
  %s2 = inlined_call_operand.vmem [shape: s32[8,1], index: 2, kind: input, shape index: {}]
  %s3 = inlined_call_operand.hbm [shape: f32[1,1,1], index: 3, kind: output, shape index: {}]
  %s4 = sld [smem:[#allocation0]]
  $region22: #{tpu_custom_call.1} parent=0
    _
  %s6 = ssub.s32 1, %s4
  %s7 = scalar_select 0, %s6, %s4
  $region1: #{tpu_custom_call.1} parent=0
    #allocation2 [shape = 'u8[512]{0}', space=vmem, size = 0x400, scoped, tag = 'output window, operand 0, single buffered']
    #allocation3 [shape = 's32[1]{0}', space=sflag, size = 0x4, scoped, tag = 'scoped memory for tpu_custom_call.1']
    %8 = vsyncpa [#allocation3], 0
    // Predicated region
    $region2: #{tpu_custom_call.1} parent=1 // pred_check
      _
    $region3: #{tpu_custom_call.1} parent=1 // pred_check_branch
      %10 = sbr.rel (0) target = $region5
    $region4: #{tpu_custom_call.1} parent=1 // pred_region
      _
    $region5: #{tpu_custom_call.1} parent=1 // pred_fallthru
      _
    // Predicated region
    $region6: #{tpu_custom_call.1} parent=1 // pred_check
      _
    $region7: #{tpu_custom_call.1} parent=1 // pred_check_branch
      %12 = sbr.rel (0) target = $region9
    $region8: #{tpu_custom_call.1} parent=1 // pred_region
      _
    $region9: #{tpu_custom_call.1} parent=1 // pred_fallthru
      _
    // Predicated region
    $region10: #{tpu_custom_call.1} parent=1 // pred_check
      _
    $region11: #{tpu_custom_call.1} parent=1 // pred_check_branch
      %14 = sbr.rel (0) target = $region13
    $region12: #{tpu_custom_call.1} parent=1 // pred_region
      _
    $region13: #{tpu_custom_call.1} parent=1 // pred_fallthru
      _
    %v15 = vld [vmem:[%s0] sm:$0xff]
    %v16 = vld [vmem:[%s0 + $0x8] sm:$0xff]
    %v17 = vld [vmem:[%s0 + $0x10] sm:$0xff]
    %v18 = vld [vmem:[%s0 + $0x18] sm:$0xff]
    %v19 = vld [vmem:[%s0 + $0x20] sm:$0xff]
    %v20 = vld [vmem:[%s0 + $0x28] sm:$0xff]
    %v21 = vld [vmem:[%s0 + $0x30] sm:$0xff]
    %v22 = vld [vmem:[%s0 + $0x38] sm:$0xff]
    %v23 = vld [vmem:[%s0 + $0x40] sm:$0xff]
    %v24 = vld [vmem:[%s0 + $0x48] sm:$0xff]
    %v25 = vld [vmem:[%s0 + $0x50] sm:$0xff]
    %v26 = vld [vmem:[%s0 + $0x58] sm:$0xff]
    %v27 = vld [vmem:[%s0 + $0x60] sm:$0xff]
    %v28 = vld [vmem:[%s0 + $0x68] sm:$0xff]
    %v29 = vld [vmem:[%s0 + $0x70] sm:$0xff]
    %v30 = vld [vmem:[%s0 + $0x78] sm:$0xff]
    %v31 = vld [vmem:[%s0 + $0x80] sm:$0xff]
    %v32 = vld [vmem:[%s0 + $0x88] sm:$0xff]
    %v33 = vld [vmem:[%s0 + $0x90] sm:$0xff]
    %v34 = vld [vmem:[%s0 + $0x98] sm:$0xff]
    %v35 = vld [vmem:[%s0 + $0xa0] sm:$0xff]
    %v36 = vld [vmem:[%s0 + $0xa8] sm:$0xff]
    %v37 = vld [vmem:[%s0 + $0xb0] sm:$0xff]
    %v38 = vld [vmem:[%s0 + $0xb8] sm:$0xff]
    %v39 = vld [vmem:[%s0 + $0xc0] sm:$0xff]
    %v40 = vld [vmem:[%s0 + $0xc8] sm:$0xff]
    %v41 = vld [vmem:[%s0 + $0xd0] sm:$0xff]
    %v42 = vld [vmem:[%s0 + $0xd8] sm:$0xff]
    %v43 = vld [vmem:[%s0 + $0xe0] sm:$0xff]
    %v44 = vld [vmem:[%s0 + $0xe8] sm:$0xff]
    %v45 = vld [vmem:[%s0 + $0xf0] sm:$0xff]
    %v46 = vld [vmem:[%s0 + $0xf8] sm:$0xff]
    %v47 = vld [vmem:[%s0 + $0x100] sm:$0xff]
    %v48 = vld [vmem:[%s0 + $0x108] sm:$0xff]
    %v49 = vld [vmem:[%s0 + $0x110] sm:$0xff]
    %v50 = vld [vmem:[%s0 + $0x118] sm:$0xff]
    %v51 = vld [vmem:[%s0 + $0x120] sm:$0xff]
    %v52 = vld [vmem:[%s0 + $0x128] sm:$0xff]
    %v53 = vld [vmem:[%s0 + $0x130] sm:$0xff]
    %v54 = vld [vmem:[%s0 + $0x138] sm:$0xff]
    %v55 = vld [vmem:[%s0 + $0x140] sm:$0xff]
    %v56 = vld [vmem:[%s0 + $0x148] sm:$0xff]
    %v57 = vld [vmem:[%s0 + $0x150] sm:$0xff]
    %v58 = vld [vmem:[%s0 + $0x158] sm:$0xff]
    %v59 = vld [vmem:[%s0 + $0x160] sm:$0xff]
    %v60 = vld [vmem:[%s0 + $0x168] sm:$0xff]
    %v61 = vld [vmem:[%s0 + $0x170] sm:$0xff]
    %v62 = vld [vmem:[%s0 + $0x178] sm:$0xff]
    %v63 = vld [vmem:[%s0 + $0x180] sm:$0xff]
    %v64 = vld [vmem:[%s0 + $0x188] sm:$0xff]
    %v65 = vld [vmem:[%s0 + $0x190] sm:$0xff]
    %v66 = vld [vmem:[%s0 + $0x198] sm:$0xff]
    %v67 = vld [vmem:[%s0 + $0x1a0] sm:$0xff]
    %v68 = vld [vmem:[%s0 + $0x1a8] sm:$0xff]
    %v69 = vld [vmem:[%s0 + $0x1b0] sm:$0xff]
    %v70 = vld [vmem:[%s0 + $0x1b8] sm:$0xff]
    %v71 = vld [vmem:[%s0 + $0x1c0] sm:$0xff]
    %v72 = vld [vmem:[%s0 + $0x1c8] sm:$0xff]
    %v73 = vld [vmem:[%s0 + $0x1d0] sm:$0xff]
    %v74 = vld [vmem:[%s0 + $0x1d8] sm:$0xff]
    %v75 = vld [vmem:[%s0 + $0x1e0] sm:$0xff]
    %v76 = vld [vmem:[%s0 + $0x1e8] sm:$0xff]
    %v77 = vld [vmem:[%s0 + $0x1f0] sm:$0xff]
    %v78 = vld [vmem:[%s0 + $0x1f8] sm:$0xff]
    %v79 = vld [vmem:[%s0 + $0x200] sm:$0xff]
    %v80 = vld [vmem:[%s0 + $0x208] sm:$0xff]
    %v81 = vld [vmem:[%s0 + $0x210] sm:$0xff]
    %v82 = vld [vmem:[%s0 + $0x218] sm:$0xff]
    %v83 = vld [vmem:[%s0 + $0x220] sm:$0xff]
    %v84 = vld [vmem:[%s0 + $0x228] sm:$0xff]
    %v85 = vld [vmem:[%s0 + $0x230] sm:$0xff]
    %v86 = vld [vmem:[%s0 + $0x238] sm:$0xff]
    %v87 = vld [vmem:[%s0 + $0x240] sm:$0xff]
    %v88 = vld [vmem:[%s0 + $0x248] sm:$0xff]
    %v89 = vld [vmem:[%s0 + $0x250] sm:$0xff]
    %v90 = vld [vmem:[%s0 + $0x258] sm:$0xff]
    %v91 = vld [vmem:[%s0 + $0x260] sm:$0xff]
    %v92 = vld [vmem:[%s0 + $0x268] sm:$0xff]
    %v93 = vld [vmem:[%s0 + $0x270] sm:$0xff]
    %v94 = vld [vmem:[%s0 + $0x278] sm:$0xff]
    %v95 = vld [vmem:[%s0 + $0x280] sm:$0xff]
    %v96 = vld [vmem:[%s0 + $0x288] sm:$0xff]
    %v97 = vld [vmem:[%s0 + $0x290] sm:$0xff]
    %v98 = vld [vmem:[%s0 + $0x298] sm:$0xff]
    %v99 = vld [vmem:[%s0 + $0x2a0] sm:$0xff]
    %v100 = vld [vmem:[%s0 + $0x2a8] sm:$0xff]
    %v101 = vld [vmem:[%s0 + $0x2b0] sm:$0xff]
    %v102 = vld [vmem:[%s0 + $0x2b8] sm:$0xff]
    %v103 = vld [vmem:[%s0 + $0x2c0] sm:$0xff]
    %v104 = vld [vmem:[%s0 + $0x2c8] sm:$0xff]
    %v105 = vld [vmem:[%s0 + $0x2d0] sm:$0xff]
    %v106 = vld [vmem:[%s0 + $0x2d8] sm:$0xff]
    %v107 = vld [vmem:[%s0 + $0x2e0] sm:$0xff]
    %v108 = vld [vmem:[%s0 + $0x2e8] sm:$0xff]
    %v109 = vld [vmem:[%s0 + $0x2f0] sm:$0xff]
    %v110 = vld [vmem:[%s0 + $0x2f8] sm:$0xff]
    %v111 = vld [vmem:[%s0 + $0x300] sm:$0xff]
    %v112 = vld [vmem:[%s0 + $0x308] sm:$0xff]
    %v113 = vld [vmem:[%s0 + $0x310] sm:$0xff]
    %v114 = vld [vmem:[%s0 + $0x318] sm:$0xff]
    %v115 = vld [vmem:[%s0 + $0x320] sm:$0xff]
    %v116 = vld [vmem:[%s0 + $0x328] sm:$0xff]
    %v117 = vld [vmem:[%s0 + $0x330] sm:$0xff]
    %v118 = vld [vmem:[%s0 + $0x338] sm:$0xff]
    %v119 = vld [vmem:[%s0 + $0x340] sm:$0xff]
    %v120 = vld [vmem:[%s0 + $0x348] sm:$0xff]
    %v121 = vld [vmem:[%s0 + $0x350] sm:$0xff]
    %v122 = vld [vmem:[%s0 + $0x358] sm:$0xff]
    %v123 = vld [vmem:[%s0 + $0x360] sm:$0xff]
    %v124 = vld [vmem:[%s0 + $0x368] sm:$0xff]
    %v125 = vld [vmem:[%s0 + $0x370] sm:$0xff]
    %v126 = vld [vmem:[%s0 + $0x378] sm:$0xff]
    %v127 = vld [vmem:[%s0 + $0x380] sm:$0xff]
    %v128 = vld [vmem:[%s0 + $0x388] sm:$0xff]
    %v129 = vld [vmem:[%s0 + $0x390] sm:$0xff]
    %v130 = vld [vmem:[%s0 + $0x398] sm:$0xff]
    %v131 = vld [vmem:[%s0 + $0x3a0] sm:$0xff]
    %v132 = vld [vmem:[%s0 + $0x3a8] sm:$0xff]
    %v133 = vld [vmem:[%s0 + $0x3b0] sm:$0xff]
    %v134 = vld [vmem:[%s0 + $0x3b8] sm:$0xff]
    %v135 = vld [vmem:[%s0 + $0x3c0] sm:$0xff]
    %v136 = vld [vmem:[%s0 + $0x3c8] sm:$0xff]
    %v137 = vld [vmem:[%s0 + $0x3d0] sm:$0xff]
    %v138 = vld [vmem:[%s0 + $0x3d8] sm:$0xff]
    %v139 = vld [vmem:[%s0 + $0x3e0] sm:$0xff]
    %v140 = vld [vmem:[%s0 + $0x3e8] sm:$0xff]
    %v141 = vld [vmem:[%s0 + $0x3f0] sm:$0xff]
    %v142 = vld [vmem:[%s0 + $0x3f8] sm:$0xff]
    %143 = vxpose.xlu0.b32.start [1/16] %v15, 128
    %144 = vxpose.xlu0.b32.cont [2/16] %v16, 128
    %145 = vxpose.xlu0.b32.cont [3/16] %v17, 128
    %146 = vxpose.xlu0.b32.cont [4/16] %v18, 128
    %147 = vxpose.xlu0.b32.cont [5/16] %v19, 128
    %148 = vxpose.xlu0.b32.cont [6/16] %v20, 128
    %149 = vxpose.xlu0.b32.cont [7/16] %v21, 128
    %150 = vxpose.xlu0.b32.cont [8/16] %v22, 128
    %151 = vxpose.xlu0.b32.cont [9/16] %v23, 128
    %152 = vxpose.xlu0.b32.cont [10/16] %v24, 128
    %153 = vxpose.xlu0.b32.cont [11/16] %v25, 128
    %154 = vxpose.xlu0.b32.cont [12/16] %v26, 128
    %155 = vxpose.xlu0.b32.cont [13/16] %v27, 128
    %156 = vxpose.xlu0.b32.cont [14/16] %v28, 128
    %157 = vxpose.xlu0.b32.cont [15/16] %v29, 128
    %158 = vxpose.xlu0.b32.end [16/16] %v30, 128
    %v159 = vpop.trf.xlu0
    %v160 = vpop.trf.xlu0
    %v161 = vpop.trf.xlu0
    %v162 = vpop.trf.xlu0
    %v163 = vpop.trf.xlu0
    %v164 = vpop.trf.xlu0
    %v165 = vpop.trf.xlu0
    %v166 = vpop.trf.xlu0
    %v167 = vpop.trf.xlu0
    %v168 = vpop.trf.xlu0
    %v169 = vpop.trf.xlu0
    %v170 = vpop.trf.xlu0
    %v171 = vpop.trf.xlu0
    %v172 = vpop.trf.xlu0
    %v173 = vpop.trf.xlu0
    %v174 = vpop.trf.xlu0
    %175 = vxpose.xlu0.b32.start [1/16] %v31, 128
    %176 = vxpose.xlu0.b32.cont [2/16] %v32, 128
    %177 = vxpose.xlu0.b32.cont [3/16] %v33, 128
    %178 = vxpose.xlu0.b32.cont [4/16] %v34, 128
    %179 = vxpose.xlu0.b32.cont [5/16] %v35, 128
    %180 = vxpose.xlu0.b32.cont [6/16] %v36, 128
    %181 = vxpose.xlu0.b32.cont [7/16] %v37, 128
    %182 = vxpose.xlu0.b32.cont [8/16] %v38, 128
    %183 = vxpose.xlu0.b32.cont [9/16] %v39, 128
    %184 = vxpose.xlu0.b32.cont [10/16] %v40, 128
    %185 = vxpose.xlu0.b32.cont [11/16] %v41, 128
    %186 = vxpose.xlu0.b32.cont [12/16] %v42, 128
    %187 = vxpose.xlu0.b32.cont [13/16] %v43, 128
    %188 = vxpose.xlu0.b32.cont [14/16] %v44, 128
    %189 = vxpose.xlu0.b32.cont [15/16] %v45, 128
    %190 = vxpose.xlu0.b32.end [16/16] %v46, 128
    %v191 = vpop.trf.xlu0
    %v192 = vpop.trf.xlu0
    %v193 = vpop.trf.xlu0
    %v194 = vpop.trf.xlu0
    %v195 = vpop.trf.xlu0
    %v196 = vpop.trf.xlu0
    %v197 = vpop.trf.xlu0
    %v198 = vpop.trf.xlu0
    %v199 = vpop.trf.xlu0
    %v200 = vpop.trf.xlu0
    %v201 = vpop.trf.xlu0
    %v202 = vpop.trf.xlu0
    %v203 = vpop.trf.xlu0
    %v204 = vpop.trf.xlu0
    %v205 = vpop.trf.xlu0
    %v206 = vpop.trf.xlu0
    %207 = vxpose.xlu0.b32.start [1/16] %v47, 128
    %208 = vxpose.xlu0.b32.cont [2/16] %v48, 128
    %209 = vxpose.xlu0.b32.cont [3/16] %v49, 128
    %210 = vxpose.xlu0.b32.cont [4/16] %v50, 128
    %211 = vxpose.xlu0.b32.cont [5/16] %v51, 128
    %212 = vxpose.xlu0.b32.cont [6/16] %v52, 128
    %213 = vxpose.xlu0.b32.cont [7/16] %v53, 128
    %214 = vxpose.xlu0.b32.cont [8/16] %v54, 128
    %215 = vxpose.xlu0.b32.cont [9/16] %v55, 128
    %216 = vxpose.xlu0.b32.cont [10/16] %v56, 128
    %217 = vxpose.xlu0.b32.cont [11/16] %v57, 128
    %218 = vxpose.xlu0.b32.cont [12/16] %v58, 128
    %219 = vxpose.xlu0.b32.cont [13/16] %v59, 128
    %220 = vxpose.xlu0.b32.cont [14/16] %v60, 128
    %221 = vxpose.xlu0.b32.cont [15/16] %v61, 128
    %222 = vxpose.xlu0.b32.end [16/16] %v62, 128
    %v223 = vpop.trf.xlu0
    %v224 = vpop.trf.xlu0
    %v225 = vpop.trf.xlu0
    %v226 = vpop.trf.xlu0
    %v227 = vpop.trf.xlu0
    %v228 = vpop.trf.xlu0
    %v229 = vpop.trf.xlu0
    %v230 = vpop.trf.xlu0
    %v231 = vpop.trf.xlu0
    %v232 = vpop.trf.xlu0
    %v233 = vpop.trf.xlu0
    %v234 = vpop.trf.xlu0
    %v235 = vpop.trf.xlu0
    %v236 = vpop.trf.xlu0
    %v237 = vpop.trf.xlu0
    %v238 = vpop.trf.xlu0
    %239 = vxpose.xlu0.b32.start [1/16] %v63, 128
    %240 = vxpose.xlu0.b32.cont [2/16] %v64, 128
    %241 = vxpose.xlu0.b32.cont [3/16] %v65, 128
    %242 = vxpose.xlu0.b32.cont [4/16] %v66, 128
    %243 = vxpose.xlu0.b32.cont [5/16] %v67, 128
    %244 = vxpose.xlu0.b32.cont [6/16] %v68, 128
    %245 = vxpose.xlu0.b32.cont [7/16] %v69, 128
    %246 = vxpose.xlu0.b32.cont [8/16] %v70, 128
    %247 = vxpose.xlu0.b32.cont [9/16] %v71, 128
    %248 = vxpose.xlu0.b32.cont [10/16] %v72, 128
    %249 = vxpose.xlu0.b32.cont [11/16] %v73, 128
    %250 = vxpose.xlu0.b32.cont [12/16] %v74, 128
    %251 = vxpose.xlu0.b32.cont [13/16] %v75, 128
    %252 = vxpose.xlu0.b32.cont [14/16] %v76, 128
    %253 = vxpose.xlu0.b32.cont [15/16] %v77, 128
    %254 = vxpose.xlu0.b32.end [16/16] %v78, 128
    %v255 = vpop.trf.xlu0
    %v256 = vpop.trf.xlu0
    %v257 = vpop.trf.xlu0
    %v258 = vpop.trf.xlu0
    %v259 = vpop.trf.xlu0
    %v260 = vpop.trf.xlu0
    %v261 = vpop.trf.xlu0
    %v262 = vpop.trf.xlu0
    %v263 = vpop.trf.xlu0
    %v264 = vpop.trf.xlu0
    %v265 = vpop.trf.xlu0
    %v266 = vpop.trf.xlu0
    %v267 = vpop.trf.xlu0
    %v268 = vpop.trf.xlu0
    %v269 = vpop.trf.xlu0
    %v270 = vpop.trf.xlu0
    %271 = vxpose.xlu0.b32.start [1/16] %v79, 128
    %272 = vxpose.xlu0.b32.cont [2/16] %v80, 128
    %273 = vxpose.xlu0.b32.cont [3/16] %v81, 128
    %274 = vxpose.xlu0.b32.cont [4/16] %v82, 128
    %275 = vxpose.xlu0.b32.cont [5/16] %v83, 128
    %276 = vxpose.xlu0.b32.cont [6/16] %v84, 128
    %277 = vxpose.xlu0.b32.cont [7/16] %v85, 128
    %278 = vxpose.xlu0.b32.cont [8/16] %v86, 128
    %279 = vxpose.xlu0.b32.cont [9/16] %v87, 128
    %280 = vxpose.xlu0.b32.cont [10/16] %v88, 128
    %281 = vxpose.xlu0.b32.cont [11/16] %v89, 128
    %282 = vxpose.xlu0.b32.cont [12/16] %v90, 128
    %283 = vxpose.xlu0.b32.cont [13/16] %v91, 128
    %284 = vxpose.xlu0.b32.cont [14/16] %v92, 128
    %285 = vxpose.xlu0.b32.cont [15/16] %v93, 128
    %286 = vxpose.xlu0.b32.end [16/16] %v94, 128
    %v287 = vpop.trf.xlu0
    %v288 = vpop.trf.xlu0
    %v289 = vpop.trf.xlu0
    %v290 = vpop.trf.xlu0
    %v291 = vpop.trf.xlu0
    %v292 = vpop.trf.xlu0
    %v293 = vpop.trf.xlu0
    %v294 = vpop.trf.xlu0
    %v295 = vpop.trf.xlu0
    %v296 = vpop.trf.xlu0
    %v297 = vpop.trf.xlu0
    %v298 = vpop.trf.xlu0
    %v299 = vpop.trf.xlu0
    %v300 = vpop.trf.xlu0
    %v301 = vpop.trf.xlu0
    %v302 = vpop.trf.xlu0
    %303 = vxpose.xlu0.b32.start [1/16] %v95, 128
    %304 = vxpose.xlu0.b32.cont [2/16] %v96, 128
    %305 = vxpose.xlu0.b32.cont [3/16] %v97, 128
    %306 = vxpose.xlu0.b32.cont [4/16] %v98, 128
    %307 = vxpose.xlu0.b32.cont [5/16] %v99, 128
    %308 = vxpose.xlu0.b32.cont [6/16] %v100, 128
    %309 = vxpose.xlu0.b32.cont [7/16] %v101, 128
    %310 = vxpose.xlu0.b32.cont [8/16] %v102, 128
    %311 = vxpose.xlu0.b32.cont [9/16] %v103, 128
    %312 = vxpose.xlu0.b32.cont [10/16] %v104, 128
    %313 = vxpose.xlu0.b32.cont [11/16] %v105, 128
    %314 = vxpose.xlu0.b32.cont [12/16] %v106, 128
    %315 = vxpose.xlu0.b32.cont [13/16] %v107, 128
    %316 = vxpose.xlu0.b32.cont [14/16] %v108, 128
    %317 = vxpose.xlu0.b32.cont [15/16] %v109, 128
    %318 = vxpose.xlu0.b32.end [16/16] %v110, 128
    %v319 = vpop.trf.xlu0
    %v320 = vpop.trf.xlu0
    %v321 = vpop.trf.xlu0
    %v322 = vpop.trf.xlu0
    %v323 = vpop.trf.xlu0
    %v324 = vpop.trf.xlu0
    %v325 = vpop.trf.xlu0
    %v326 = vpop.trf.xlu0
    %v327 = vpop.trf.xlu0
    %v328 = vpop.trf.xlu0
    %v329 = vpop.trf.xlu0
    %v330 = vpop.trf.xlu0
    %v331 = vpop.trf.xlu0
    %v332 = vpop.trf.xlu0
    %v333 = vpop.trf.xlu0
    %v334 = vpop.trf.xlu0
    %335 = vxpose.xlu0.b32.start [1/16] %v111, 128
    %336 = vxpose.xlu0.b32.cont [2/16] %v112, 128
    %337 = vxpose.xlu0.b32.cont [3/16] %v113, 128
    %338 = vxpose.xlu0.b32.cont [4/16] %v114, 128
    %339 = vxpose.xlu0.b32.cont [5/16] %v115, 128
    %340 = vxpose.xlu0.b32.cont [6/16] %v116, 128
    %341 = vxpose.xlu0.b32.cont [7/16] %v117, 128
    %342 = vxpose.xlu0.b32.cont [8/16] %v118, 128
    %343 = vxpose.xlu0.b32.cont [9/16] %v119, 128
    %344 = vxpose.xlu0.b32.cont [10/16] %v120, 128
    %345 = vxpose.xlu0.b32.cont [11/16] %v121, 128
    %346 = vxpose.xlu0.b32.cont [12/16] %v122, 128
    %347 = vxpose.xlu0.b32.cont [13/16] %v123, 128
    %348 = vxpose.xlu0.b32.cont [14/16] %v124, 128
    %349 = vxpose.xlu0.b32.cont [15/16] %v125, 128
    %350 = vxpose.xlu0.b32.end [16/16] %v126, 128
    %v351 = vpop.trf.xlu0
    %v352 = vpop.trf.xlu0
    %v353 = vpop.trf.xlu0
    %v354 = vpop.trf.xlu0
    %v355 = vpop.trf.xlu0
    %v356 = vpop.trf.xlu0
    %v357 = vpop.trf.xlu0
    %v358 = vpop.trf.xlu0
    %v359 = vpop.trf.xlu0
    %v360 = vpop.trf.xlu0
    %v361 = vpop.trf.xlu0
    %v362 = vpop.trf.xlu0
    %v363 = vpop.trf.xlu0
    %v364 = vpop.trf.xlu0
    %v365 = vpop.trf.xlu0
    %v366 = vpop.trf.xlu0
    %367 = vxpose.xlu0.b32.start [1/16] %v127, 128
    %368 = vxpose.xlu0.b32.cont [2/16] %v128, 128
    %369 = vxpose.xlu0.b32.cont [3/16] %v129, 128
    %370 = vxpose.xlu0.b32.cont [4/16] %v130, 128
    %371 = vxpose.xlu0.b32.cont [5/16] %v131, 128
    %372 = vxpose.xlu0.b32.cont [6/16] %v132, 128
    %373 = vxpose.xlu0.b32.cont [7/16] %v133, 128
    %374 = vxpose.xlu0.b32.cont [8/16] %v134, 128
    %375 = vxpose.xlu0.b32.cont [9/16] %v135, 128
    %376 = vxpose.xlu0.b32.cont [10/16] %v136, 128
    %377 = vxpose.xlu0.b32.cont [11/16] %v137, 128
    %378 = vxpose.xlu0.b32.cont [12/16] %v138, 128
    %379 = vxpose.xlu0.b32.cont [13/16] %v139, 128
    %380 = vxpose.xlu0.b32.cont [14/16] %v140, 128
    %381 = vxpose.xlu0.b32.cont [15/16] %v141, 128
    %382 = vxpose.xlu0.b32.end [16/16] %v142, 128
    %v383 = vpop.trf.xlu0
    %v384 = vpop.trf.xlu0
    %v385 = vpop.trf.xlu0
    %v386 = vpop.trf.xlu0
    %v387 = vpop.trf.xlu0
    %v388 = vpop.trf.xlu0
    %v389 = vpop.trf.xlu0
    %v390 = vpop.trf.xlu0
    %v391 = vpop.trf.xlu0
    %v392 = vpop.trf.xlu0
    %v393 = vpop.trf.xlu0
    %v394 = vpop.trf.xlu0
    %v395 = vpop.trf.xlu0
    %v396 = vpop.trf.xlu0
    %v397 = vpop.trf.xlu0
    %v398 = vpop.trf.xlu0
    %399 = vmax.xlane.f32.xlu0 %v159
    %v400 = vpop.xlane.xlu0 %399
    %401 = vmax.xlane.f32.xlu0 %v191
    %v402 = vpop.xlane.xlu0 %401
    %403 = vmax.xlane.f32.xlu0 %v223
    %v404 = vpop.xlane.xlu0 %403
    %405 = vmax.xlane.f32.xlu0 %v255
    %v406 = vpop.xlane.xlu0 %405
    %407 = vmax.xlane.f32.xlu0 %v287
    %v408 = vpop.xlane.xlu0 %407
    %409 = vmax.xlane.f32.xlu0 %v319
    %v410 = vpop.xlane.xlu0 %409
    %411 = vmax.xlane.f32.xlu0 %v351
    %v412 = vpop.xlane.xlu0 %411
    %413 = vmax.xlane.f32.xlu0 %v383
    %v414 = vpop.xlane.xlu0 %413
    %v415 = vsub.f32 %v159, %v400
    %v416 = vsub.f32 %v191, %v402
    %v417 = vsub.f32 %v223, %v404
    %v418 = vsub.f32 %v255, %v406
    %v419 = vsub.f32 %v287, %v408
    %v420 = vsub.f32 %v319, %v410
    %v421 = vsub.f32 %v351, %v412
    %v422 = vsub.f32 %v383, %v414
    %v423 = vmul.f32 %v415, 1.442695
    %v424 = vpow.pop %v423
    %v425 = vmul.f32 %v416, 1.442695
    %v426 = vpow.pop %v425
    %v427 = vmul.f32 %v417, 1.442695
    %v428 = vpow.pop %v427
    %v429 = vmul.f32 %v418, 1.442695
    %v430 = vpow.pop %v429
    %v431 = vmul.f32 %v419, 1.442695
    %v432 = vpow.pop %v431
    %v433 = vmul.f32 %v420, 1.442695
    %v434 = vpow.pop %v433
    %v435 = vmul.f32 %v421, 1.442695
    %v436 = vpow.pop %v435
    %v437 = vmul.f32 %v422, 1.442695
    %v438 = vpow.pop %v437
    %439 = vadd.xlane.f32.xlu0 %v424
    %v440 = vpop.xlane.xlu0 %439
    %441 = vadd.xlane.f32.xlu0 %v426
    %v442 = vpop.xlane.xlu0 %441
    %443 = vadd.xlane.f32.xlu0 %v428
    %v444 = vpop.xlane.xlu0 %443
    %445 = vadd.xlane.f32.xlu0 %v430
    %v446 = vpop.xlane.xlu0 %445
    %447 = vadd.xlane.f32.xlu0 %v432
    %v448 = vpop.xlane.xlu0 %447
    %449 = vadd.xlane.f32.xlu0 %v434
    %v450 = vpop.xlane.xlu0 %449
    %451 = vadd.xlane.f32.xlu0 %v436
    %v452 = vpop.xlane.xlu0 %451
    %453 = vadd.xlane.f32.xlu0 %v438
    %v454 = vpop.xlane.xlu0 %453
    %v455 = vlog2.pop %v440
    %v456 = vmul.f32 %v455, 0.6931472
    %v457 = vlog2.pop %v442
    %v458 = vmul.f32 %v457, 0.6931472
    %v459 = vlog2.pop %v444
    %v460 = vmul.f32 %v459, 0.6931472
    %v461 = vlog2.pop %v446
    %v462 = vmul.f32 %v461, 0.6931472
    %v463 = vlog2.pop %v448
    %v464 = vmul.f32 %v463, 0.6931472
    %v465 = vlog2.pop %v450
    %v466 = vmul.f32 %v465, 0.6931472
    %v467 = vlog2.pop %v452
    %v468 = vmul.f32 %v467, 0.6931472
    %v469 = vlog2.pop %v454
    %v470 = vmul.f32 %v469, 0.6931472
    %v471 = vadd.f32 %v400, %v456
    %v472 = vadd.f32 %v402, %v458
    %v473 = vadd.f32 %v404, %v460
    %v474 = vadd.f32 %v406, %v462
    %v475 = vadd.f32 %v408, %v464
    %v476 = vadd.f32 %v410, %v466
    %v477 = vadd.f32 %v412, %v468
    %v478 = vadd.f32 %v414, %v470
    %v479 = vlaneseq
    %v480 = vand.u32 %v479, 127
    %v481 = vld [vmem:[%s1] sm:$0xff]
    %v482 = vlaneseq
    %v483 = vshrl.u32 %v482, 7
    %v484 = vsub.s32 0, %v483
    %v485 = vrot.slane %v481, %v484
    %487 = vbcast.lane.b32.xlu0 %v485, 256
    %v488 = vpop.permute.xlu0 %487
    %v489 = vlaneseq
    %v490 = vshrl.u32 %v489, 7
    %v491 = vsub.s32 1, %v490
    %v492 = vrot.slane %v481, %v491
    %494 = vbcast.lane.b32.xlu0 %v492, 256
    %v495 = vpop.permute.xlu0 %494
    %v496 = vlaneseq
    %v497 = vshrl.u32 %v496, 7
    %v498 = vsub.s32 2, %v497
    %v499 = vrot.slane %v481, %v498
    %501 = vbcast.lane.b32.xlu0 %v499, 256
    %v502 = vpop.permute.xlu0 %501
    %v503 = vlaneseq
    %v504 = vshrl.u32 %v503, 7
    %v505 = vsub.s32 3, %v504
    %v506 = vrot.slane %v481, %v505
    %508 = vbcast.lane.b32.xlu0 %v506, 256
    %v509 = vpop.permute.xlu0 %508
    %v510 = vlaneseq
    %v511 = vshrl.u32 %v510, 7
    %v512 = vsub.s32 4, %v511
    %v513 = vrot.slane %v481, %v512
    %515 = vbcast.lane.b32.xlu0 %v513, 256
    %v516 = vpop.permute.xlu0 %515
    %v517 = vlaneseq
    %v518 = vshrl.u32 %v517, 7
    %v519 = vsub.s32 5, %v518
    %v520 = vrot.slane %v481, %v519
    %522 = vbcast.lane.b32.xlu0 %v520, 256
    %v523 = vpop.permute.xlu0 %522
    %v524 = vlaneseq
    %v525 = vshrl.u32 %v524, 7
    %v526 = vsub.s32 6, %v525
    %v527 = vrot.slane %v481, %v526
    %529 = vbcast.lane.b32.xlu0 %v527, 256
    %v530 = vpop.permute.xlu0 %529
    %v531 = vlaneseq
    %v532 = vshrl.u32 %v531, 7
    %v533 = vsub.s32 7, %v532
    %v534 = vrot.slane %v481, %v533
    %536 = vbcast.lane.b32.xlu0 %v534, 256
    %v537 = vpop.permute.xlu0 %536
    %vm538 = vcmp.eq.s32.totalorder %v480, %v488
    %vm539 = vcmp.eq.s32.totalorder %v480, %v495
    %vm540 = vcmp.eq.s32.totalorder %v480, %v502
    %vm541 = vcmp.eq.s32.totalorder %v480, %v509
    %vm542 = vcmp.eq.s32.totalorder %v480, %v516
    %vm543 = vcmp.eq.s32.totalorder %v480, %v523
    %vm544 = vcmp.eq.s32.totalorder %v480, %v530
    %vm545 = vcmp.eq.s32.totalorder %v480, %v537
    %v546 = vsel %vm538, %v159, 0.0
    %v547 = vsel %vm539, %v191, 0.0
    %v548 = vsel %vm540, %v223, 0.0
    %v549 = vsel %vm541, %v255, 0.0
    %v550 = vsel %vm542, %v287, 0.0
    %v551 = vsel %vm543, %v319, 0.0
    %v552 = vsel %vm544, %v351, 0.0
    %v553 = vsel %vm545, %v383, 0.0
    %554 = vadd.xlane.f32.xlu0 %v546
    %v555 = vpop.xlane.xlu0 %554
    %556 = vadd.xlane.f32.xlu0 %v547
    %v557 = vpop.xlane.xlu0 %556
    %558 = vadd.xlane.f32.xlu0 %v548
    %v559 = vpop.xlane.xlu0 %558
    %560 = vadd.xlane.f32.xlu0 %v549
    %v561 = vpop.xlane.xlu0 %560
    %562 = vadd.xlane.f32.xlu0 %v550
    %v563 = vpop.xlane.xlu0 %562
    %564 = vadd.xlane.f32.xlu0 %v551
    %v565 = vpop.xlane.xlu0 %564
    %566 = vadd.xlane.f32.xlu0 %v552
    %v567 = vpop.xlane.xlu0 %566
    %568 = vadd.xlane.f32.xlu0 %v553
    %v569 = vpop.xlane.xlu0 %568
    %v570 = vsub.f32 %v471, %v555
    %v571 = vsub.f32 %v472, %v557
    %v572 = vsub.f32 %v473, %v559
    %v573 = vsub.f32 %v474, %v561
    %v574 = vsub.f32 %v475, %v563
    %v575 = vsub.f32 %v476, %v565
    %v576 = vsub.f32 %v477, %v567
    %v577 = vsub.f32 %v478, %v569
    %v578 = vld [vmem:[%s2] sm:$0xff]
    %579 = vset.pattern.permute.xlu0 0
    %580 = vperm.xlu0 %579, %v578
    %v581 = vpop.permute.xlu0 %580
    %vm582 = vcmp.lt.s32.totalorder %v480, %v581
    %v591 = vlaneseq
    %v592 = vshrl.u32 %v591, 7
    %v593 = vsub.s32 %v480, %v592
    %v594 = vrot.slane %v570, %v593
    %v595 = vlaneseq
    %v596 = vshrl.u32 %v595, 7
    %v597 = vsub.s32 %v480, %v596
    %v598 = vrot.slane %v571, %v597
    %v599 = vlaneseq
    %v600 = vshrl.u32 %v599, 7
    %v601 = vsub.s32 %v480, %v600
    %v602 = vrot.slane %v572, %v601
    %v603 = vlaneseq
    %v604 = vshrl.u32 %v603, 7
    %v605 = vsub.s32 %v480, %v604
    %v606 = vrot.slane %v573, %v605
    %v607 = vlaneseq
    %v608 = vshrl.u32 %v607, 7
    %v609 = vsub.s32 %v480, %v608
    %v610 = vrot.slane %v574, %v609
    %v611 = vlaneseq
    %v612 = vshrl.u32 %v611, 7
    %v613 = vsub.s32 %v480, %v612
    %v614 = vrot.slane %v575, %v613
    %v615 = vlaneseq
    %v616 = vshrl.u32 %v615, 7
    %v617 = vsub.s32 %v480, %v616
    %v618 = vrot.slane %v576, %v617
    %v619 = vlaneseq
    %v620 = vshrl.u32 %v619, 7
    %v621 = vsub.s32 %v480, %v620
    %v622 = vrot.slane %v577, %v621
    %vm623 = vcmask 1041409
    %v624 = vsel %vm623, %v598, %v594
    %vm625 = vcmask 1042434
    %v626 = vsel %vm625, %v602, %v624
    %vm627 = vcmask 1043459
    %v628 = vsel %vm627, %v606, %v626
    %vm629 = vcmask 1044484
    %v630 = vsel %vm629, %v610, %v628
    %vm631 = vcmask 1045509
    %v632 = vsel %vm631, %v614, %v630
    %vm633 = vcmask 1046534
    %v634 = vsel %vm633, %v618, %v632
    %vm635 = vcmask 1047559
    %v636 = vsel %vm635, %v622, %v634
    %v638 = vsel %vm582, %v636, 0.0
    %vm639 = vcmask 64512
    %v640 = vsel %vm639, %v638, 0.0
    %641 = vadd.xlane.f32.xlu0 %v640
    %v642 = vpop.xlane.xlu0 %641
    %v643 = vrot.slane %v642, 4
    %v644 = vadd.f32 %v642, %v643
    %v645 = vrot.slane %v644, 2
    %v646 = vadd.f32 %v644, %v645
    %v647 = vrot.slane %v646, 1
    %v648 = vadd.f32 %v646, %v647
    %s649 = vtos %v648
    %v650 = vstv %s649
    %vm651 = vcmask 0
    %652 = vst.msk [vmem:[#allocation2] sm:$0x1] %vm651, %v650
    // Predicated region
    $region14: #{tpu_custom_call.1} parent=1 // pred_check
      _
    $region15: #{tpu_custom_call.1} parent=1 // pred_check_branch
      %654 = sbr.rel (0) target = $region17
    $region16: #{tpu_custom_call.1} parent=1 // pred_region
      %s656 = ssub.s32 16, 16
      %657 = vsyncadd [#allocation3], %s656
      %s659 = sshll.u32 [#allocation2], 4
      %s660 = int_to_ptr.vmem [resolvable:$true] %s659
      %662 = dma.vmem_to_hbm [thread:$0]  %s660, 16, %s3, [#allocation3]
    $region17: #{tpu_custom_call.1} parent=1 // pred_fallthru
      _
    // Predicated region
    $region18: #{tpu_custom_call.1} parent=1 // pred_check
      _
    $region19: #{tpu_custom_call.1} parent=1 // pred_check_branch
      %664 = sbr.rel (0) target = $region21
    $region20: #{tpu_custom_call.1} parent=1 // pred_region
      %665 = dma.done [#allocation3], 16
    $region21: #{tpu_custom_call.1} parent=1 // pred_fallthru
      _
    %666 = vsyncpa [#allocation3], 1

</llo_original>
